<compile_context>
chip_gen: v6e
topology: v6e:2x2x1
jax: 0.10.0
libtpu: 0.0.40
codegen_flags: <defaults>
</compile_context>

<pallas_src>
import jax
import jax.numpy as jnp
from jax.experimental import pallas as pl
from jax.experimental.pallas import tpu as pltpu


def _round_up(v, m):
    return (v + m - 1) // m * m


# --------------------------------------------------------------------------
# Kernels
# --------------------------------------------------------------------------
def _fused_kernel(a_ref, x_ref, inv_ref, w1l_ref, w1r_ref, b1_ref,
                  w2l_ref, w2r_ref, b2_ref, out_ref):
    """Both SAGE layers in one invocation; A (int8) stays VMEM-resident."""
    bf16 = jnp.bfloat16
    a = a_ref[...].astype(bf16)                       # int8 counts -> bf16 (VPU)
    # layer 1: mean aggregation + fused projections + ReLU
    agg1 = (jnp.dot(a, x_ref[...], preferred_element_type=jnp.float32)
            * inv_ref[...]).astype(bf16)
    h = (jnp.dot(agg1, w1l_ref[...], preferred_element_type=jnp.float32)
         + jnp.dot(x_ref[...], w1r_ref[...], preferred_element_type=jnp.float32)
         + b1_ref[...])
    h = jnp.maximum(h, 0.0).astype(bf16)
    # layer 2 (reordered): out = A @ (h @ W2_l) * inv_deg + h @ W2_r + b2
    p = jnp.dot(h, w2l_ref[...], preferred_element_type=jnp.float32).astype(bf16)
    out = (jnp.dot(a, p, preferred_element_type=jnp.float32) * inv_ref[...]
           + jnp.dot(h, w2r_ref[...], preferred_element_type=jnp.float32)
           + b2_ref[...])
    out_ref[...] = out.astype(out_ref.dtype)


def _layer1_stream_kernel(a_ref, xk_ref, xr_ref, inv_ref, w1l_ref, w1r_ref,
                          b1_ref, w2l_ref, h_ref, p_ref, acc_ref):
    """Streaming layer 1: K-blocked A @ x with f32 accumulator, finalize at last K."""
    k = pl.program_id(1)

    @pl.when(k == 0)
    def _():
        acc_ref[...] = jnp.zeros_like(acc_ref)

    acc_ref[...] += jnp.dot(a_ref[...].astype(jnp.bfloat16), xk_ref[...],
                            preferred_element_type=jnp.float32)

    @pl.when(k == pl.num_programs(1) - 1)
    def _():
        agg = (acc_ref[...] * inv_ref[...]).astype(jnp.bfloat16)   # exact f32 1/deg
        h = (jnp.dot(agg, w1l_ref[...], preferred_element_type=jnp.float32)
             + jnp.dot(xr_ref[...], w1r_ref[...], preferred_element_type=jnp.float32)
             + b1_ref[...])
        h = jnp.maximum(h, 0.0).astype(jnp.bfloat16)
        h_ref[...] = h
        # pre-project for layer 2's reordered  A @ (h @ W2_l)
        p_ref[...] = jnp.dot(h, w2l_ref[...],
                             preferred_element_type=jnp.float32).astype(jnp.bfloat16)


def _layer2_stream_kernel(a_ref, pk_ref, hr_ref, inv_ref, w2r_ref, b2_ref,
                          out_ref, acc_ref):
    """Streaming layer 2: out = (A @ p) * inv_deg + h @ W2_r + b2."""
    k = pl.program_id(1)

    @pl.when(k == 0)
    def _():
        acc_ref[...] = jnp.zeros_like(acc_ref)

    acc_ref[...] += jnp.dot(a_ref[...].astype(jnp.bfloat16), pk_ref[...],
                            preferred_element_type=jnp.float32)

    @pl.when(k == pl.num_programs(1) - 1)
    def _():
        out = (acc_ref[...] * inv_ref[...]
               + jnp.dot(hr_ref[...], w2r_ref[...], preferred_element_type=jnp.float32)
               + b2_ref[...])
        out_ref[...] = out.astype(out_ref.dtype)


# --------------------------------------------------------------------------
# Wrapper
# --------------------------------------------------------------------------
def type_gnn_encoder(x, edge_index, params, *, block_rows=512, fuse=None):
    """x: [N, Cin] f32, edge_index: [2, E] int32, params: dict of weights.

    block_rows must be a multiple of 128 (row/K tile for the streaming path).
    """
    n, cin = x.shape
    hid = params["w1l"].shape[1]
    cout = params["w2l"].shape[1]
    f32, bf16 = jnp.float32, jnp.bfloat16

    cin_pad = _round_up(cin, 128)
    hid_pad = _round_up(hid, 128)
    cout_pad = _round_up(cout, 128)

    if fuse is None:
        # int8 A + bf16 upcast + x/h/p comfortably fit VMEM at this size on
        # all of v5e/v6e/v7x.
        fuse = _round_up(n, 128) <= 2048

    if fuse:
        n_pad = _round_up(n, 128)
        tm = n_pad
    else:
        tm = min(block_rows, _round_up(n, 128))
        # pad N up to the chosen row block (no silent fallback to 128 blocks)
        n_pad = _round_up(n, tm)

    # O(E) construction, no dense f32 intermediate:
    #   int8 adjacency edge counts (duplicate edges counted, as PyG mean does)
    #   + f32 inverse in-degree applied after the matmul inside the kernels.
    src, dst = edge_index[0], edge_index[1]
    e = src.shape[0]
    a = jnp.zeros((n_pad, n_pad), jnp.int8).at[dst, src].add(
        jnp.ones((e,), jnp.int8))
    deg = jnp.zeros((n_pad,), f32).at[dst].add(1.0)
    inv_deg = (1.0 / jnp.maximum(deg, 1.0)).reshape(n_pad, 1)

    x_p = jnp.zeros((n_pad, cin_pad), f32).at[:n, :cin].set(x).astype(bf16)

    w1l = jnp.zeros((cin_pad, hid_pad), f32).at[:cin, :hid].set(params["w1l"]).astype(bf16)
    w1r = jnp.zeros((cin_pad, hid_pad), f32).at[:cin, :hid].set(params["w1r"]).astype(bf16)
    b1 = jnp.zeros((1, hid_pad), f32).at[:, :hid].set(params["b1"])
    w2l = jnp.zeros((hid_pad, cout_pad), f32).at[:hid, :cout].set(params["w2l"]).astype(bf16)
    w2r = jnp.zeros((hid_pad, cout_pad), f32).at[:hid, :cout].set(params["w2r"]).astype(bf16)
    b2 = jnp.zeros((1, cout_pad), f32).at[:, :cout].set(params["b2"])

    if fuse:
        # Single grid-less invocation: whole (padded) arrays live in VMEM,
        # A is read from HBM once, h/p never touch HBM.
        out = pl.pallas_call(
            _fused_kernel,
            out_shape=jax.ShapeDtypeStruct((n_pad, cout_pad), f32),
        )(a, x_p, inv_deg, w1l, w1r, b1, w2l, w2r, b2)
        return out[:n, :cout]

    # ---------------- streaming path: (rows, K) grid ----------------
    tk = tm
    grid = (n_pad // tm, n_pad // tk)
    cparams = pltpu.CompilerParams(
        dimension_semantics=("parallel", "arbitrary"))

    # layer 1: h = relu((A@x)*inv @ ... ), also emits p = h @ W2_l
    h, p = pl.pallas_call(
        _layer1_stream_kernel,
        grid=grid,
        in_specs=[
            pl.BlockSpec((tm, tk), lambda i, k: (i, k)),            # A tile (int8)
            pl.BlockSpec((tk, cin_pad), lambda i, k: (k, 0)),       # x K block
            pl.BlockSpec((tm, cin_pad), lambda i, k: (i, 0)),       # x rows (root term)
            pl.BlockSpec((tm, 1), lambda i, k: (i, 0)),             # 1/deg rows
            pl.BlockSpec((cin_pad, hid_pad), lambda i, k: (0, 0)),  # W1_l
            pl.BlockSpec((cin_pad, hid_pad), lambda i, k: (0, 0)),  # W1_r
            pl.BlockSpec((1, hid_pad), lambda i, k: (0, 0)),        # b1
            pl.BlockSpec((hid_pad, cout_pad), lambda i, k: (0, 0)), # W2_l
        ],
        out_specs=[
            pl.BlockSpec((tm, hid_pad), lambda i, k: (i, 0)),
            pl.BlockSpec((tm, cout_pad), lambda i, k: (i, 0)),
        ],
        out_shape=[
            jax.ShapeDtypeStruct((n_pad, hid_pad), bf16),
            jax.ShapeDtypeStruct((n_pad, cout_pad), bf16),
        ],
        scratch_shapes=[pltpu.VMEM((tm, cin_pad), f32)],
        compiler_params=cparams,
    )(a, x_p, x_p, inv_deg, w1l, w1r, b1, w2l)

    # layer 2: out = (A @ p) * inv_deg + h @ W2_r + b2
    out = pl.pallas_call(
        _layer2_stream_kernel,
        grid=grid,
        in_specs=[
            pl.BlockSpec((tm, tk), lambda i, k: (i, k)),            # A tile (int8)
            pl.BlockSpec((tk, cout_pad), lambda i, k: (k, 0)),      # p K block
            pl.BlockSpec((tm, hid_pad), lambda i, k: (i, 0)),       # h rows (root term)
            pl.BlockSpec((tm, 1), lambda i, k: (i, 0)),             # 1/deg rows
            pl.BlockSpec((hid_pad, cout_pad), lambda i, k: (0, 0)), # W2_r
            pl.BlockSpec((1, cout_pad), lambda i, k: (0, 0)),       # b2
        ],
        out_specs=pl.BlockSpec((tm, cout_pad), lambda i, k: (i, 0)),
        out_shape=jax.ShapeDtypeStruct((n_pad, cout_pad), f32),
        scratch_shapes=[pltpu.VMEM((tm, cout_pad), f32)],
        compiler_params=cparams,
    )(a, p, h, inv_deg, w2r, b2)

    return out[:n, :cout]


# --------------------------------------------------------------------------
# Params + references
# --------------------------------------------------------------------------
def _init_params(key, in_channels, hidden_channels, out_channels):
    """Deterministic synthetic init (SAGEConv: lin_l has bias, lin_r has none)."""
    ks = jax.random.split(key, 6)

    def glorot(k, fan_in, fan_out):
        lim = (6.0 / (fan_in + fan_out)) ** 0.5
        # stored pre-transposed: [fan_in, fan_out] so kernel does x @ W
        return jax.random.uniform(k, (fan_in, fan_out), jnp.float32, -lim, lim)

    return {
        "w1l": glorot(ks[0], in_channels, hidden_channels),
        "w1r": glorot(ks[1], in_channels, hidden_channels),
        "b1": jax.random.uniform(ks[2], (1, hidden_channels), jnp.float32, -0.1, 0.1),
        "w2l": glorot(ks[3], hidden_channels, out_channels),
        "w2r": glorot(ks[4], hidden_channels, out_channels),
        "b2": jax.random.uniform(ks[5], (1, out_channels), jnp.float32, -0.1, 0.1),
    }


def _reference_f32(x, edge_index, params):
    """Full-precision f32 reference of the original module's forward."""
    n = x.shape[0]
    src, dst = edge_index[0], edge_index[1]
    a = jnp.zeros((n, n), jnp.float32).at[dst, src].add(1.0)
    a = a / jnp.maximum(jnp.sum(a, axis=1, keepdims=True), 1.0)
    hi = jax.lax.Precision.HIGHEST
    h = jnp.maximum(
        jnp.dot(jnp.dot(a, x, precision=hi), params["w1l"], precision=hi)
        + jnp.dot(x, params["w1r"], precision=hi) + params["b1"], 0.0)
    return (jnp.dot(jnp.dot(a, h, precision=hi), params["w2l"], precision=hi)
            + jnp.dot(h, params["w2r"], precision=hi) + params["b2"])


def _reference_mixed(x, edge_index, params):
    """Pure-JAX reference using the kernel's exact mixed-precision scheme."""
    bf = jnp.bfloat16
    n = x.shape[0]
    src, dst = edge_index[0], edge_index[1]
    a = jnp.zeros((n, n), jnp.float32).at[dst, src].add(1.0).astype(bf)  # exact counts
    deg = jnp.zeros((n,), jnp.float32).at[dst].add(1.0)
    inv = (1.0 / jnp.maximum(deg, 1.0)).reshape(n, 1)
    x_bf = x.astype(bf)
    agg = (jnp.dot(a, x_bf, preferred_element_type=jnp.float32) * inv).astype(bf)
    h = (jnp.dot(agg, params["w1l"].astype(bf), preferred_element_type=jnp.float32)
         + jnp.dot(x_bf, params["w1r"].astype(bf), preferred_element_type=jnp.float32)
         + params["b1"])
    h = jnp.maximum(h, 0.0).astype(bf)
    p = jnp.dot(h, params["w2l"].astype(bf), preferred_element_type=jnp.float32).astype(bf)
    return (jnp.dot(a, p, preferred_element_type=jnp.float32) * inv
            + jnp.dot(h, params["w2r"].astype(bf), preferred_element_type=jnp.float32)
            + params["b2"])


if __name__ == "__main__":
    key = jax.random.PRNGKey(0)
    k_x, k_e, k_p, k_x2, k_e2 = jax.random.split(key, 5)

    in_channels, hidden_channels, out_channels = 8, 32, 16
    params = _init_params(k_p, in_channels, hidden_channels, out_channels)

    # ---- small graph: fused single-kernel path ----
    N, E = 16, 40
    x = jax.random.normal(k_x, (N, in_channels), jnp.float32)
    edge_index = jax.random.randint(k_e, (2, E), 0, N, jnp.int32)

    out = type_gnn_encoder(x, edge_index, params)
    jax.block_until_ready(out)
    assert out.shape == (N, out_channels)

    ref_mixed = _reference_mixed(x, edge_index, params)
    assert jnp.allclose(out, ref_mixed, atol=1e-3, rtol=1e-3), \
        float(jnp.max(jnp.abs(out - ref_mixed)))
    ref_f32 = _reference_f32(x, edge_index, params)
    assert jnp.allclose(out, ref_f32, atol=3e-2, rtol=3e-2), \
        float(jnp.max(jnp.abs(out - ref_f32)))

    # ---- larger graph: exercise the K-blocked streaming path (grid=(3,3)) ----
    N2, E2 = 300, 1500
    x2 = jax.random.normal(k_x2, (N2, in_channels), jnp.float32)
    edge_index2 = jax.random.randint(k_e2, (2, E2), 0, N2, jnp.int32)

    out2 = type_gnn_encoder(x2, edge_index2, params, block_rows=128, fuse=False)
    jax.block_until_ready(out2)
    assert out2.shape == (N2, out_channels)

    ref2_mixed = _reference_mixed(x2, edge_index2, params)
    assert jnp.allclose(out2, ref2_mixed, atol=1e-3, rtol=1e-3), \
        float(jnp.max(jnp.abs(out2 - ref2_mixed)))
    ref2_f32 = _reference_f32(x2, edge_index2, params)
    assert jnp.allclose(out2, ref2_f32, atol=3e-2, rtol=3e-2), \
        float(jnp.max(jnp.abs(out2 - ref2_f32)))

    print("KERNEL_OK")
</pallas_src>

<mosaic_0001>
module attributes {stable_mosaic.version = 11 : i64} {
  func.func @_fused_kernel(%arg0: memref<128x128xi8, #tpu.memory_space<vmem>>, %arg1: memref<128x128xbf16, #tpu.memory_space<vmem>>, %arg2: memref<128x1xf32, #tpu.memory_space<vmem>>, %arg3: memref<128x128xbf16, #tpu.memory_space<vmem>>, %arg4: memref<128x128xbf16, #tpu.memory_space<vmem>>, %arg5: memref<1x128xf32, #tpu.memory_space<vmem>>, %arg6: memref<128x128xbf16, #tpu.memory_space<vmem>>, %arg7: memref<128x128xbf16, #tpu.memory_space<vmem>>, %arg8: memref<1x128xf32, #tpu.memory_space<vmem>>, %arg9: memref<128x128xf32, #tpu.memory_space<vmem>>) attributes {dimension_semantics = [], scalar_prefetch = 0 : i64, scratch_operands = 0 : i64, tpu.core_type = #tpu.core_type<tc>} {
    %c0 = arith.constant 0 : index
    %c0_0 = arith.constant 0 : index
    %0 = vector.load %arg0[%c0, %c0_0] : memref<128x128xi8, #tpu.memory_space<vmem>>, vector<128x128xi8>
    %1 = arith.sitofp %0 : vector<128x128xi8> to vector<128x128xbf16>
    %c0_1 = arith.constant 0 : index
    %c0_2 = arith.constant 0 : index
    %2 = vector.load %arg1[%c0_1, %c0_2] : memref<128x128xbf16, #tpu.memory_space<vmem>>, vector<128x128xbf16>
    %cst = arith.constant dense<0.000000e+00> : vector<128x128xf32>
    %3 = tpu.matmul %1, %2, %cst {dimension_numbers = #tpu.dot_dimension_numbers<[1], [0], [0], [1], [0, 0, 1, 1], [], []>} : vector<128x128xbf16>, vector<128x128xbf16>, vector<128x128xf32> -> vector<128x128xf32>
    %c0_3 = arith.constant 0 : index
    %c0_4 = arith.constant 0 : index
    %4 = vector.load %arg2[%c0_3, %c0_4] : memref<128x1xf32, #tpu.memory_space<vmem>>, vector<128x1xf32>
    %5 = vector.broadcast %4 : vector<128x1xf32> to vector<128x128xf32>
    %6 = arith.mulf %3, %5 : vector<128x128xf32>
    %7 = arith.truncf %6 : vector<128x128xf32> to vector<128x128xbf16>
    %c0_5 = arith.constant 0 : index
    %c0_6 = arith.constant 0 : index
    %8 = vector.load %arg3[%c0_5, %c0_6] : memref<128x128xbf16, #tpu.memory_space<vmem>>, vector<128x128xbf16>
    %cst_7 = arith.constant dense<0.000000e+00> : vector<128x128xf32>
    %9 = tpu.matmul %7, %8, %cst_7 {dimension_numbers = #tpu.dot_dimension_numbers<[1], [0], [0], [1], [0, 0, 1, 1], [], []>} : vector<128x128xbf16>, vector<128x128xbf16>, vector<128x128xf32> -> vector<128x128xf32>
    %c0_8 = arith.constant 0 : index
    %c0_9 = arith.constant 0 : index
    %10 = vector.load %arg1[%c0_8, %c0_9] : memref<128x128xbf16, #tpu.memory_space<vmem>>, vector<128x128xbf16>
    %c0_10 = arith.constant 0 : index
    %c0_11 = arith.constant 0 : index
    %11 = vector.load %arg4[%c0_10, %c0_11] : memref<128x128xbf16, #tpu.memory_space<vmem>>, vector<128x128xbf16>
    %cst_12 = arith.constant dense<0.000000e+00> : vector<128x128xf32>
    %12 = tpu.matmul %10, %11, %cst_12 {dimension_numbers = #tpu.dot_dimension_numbers<[1], [0], [0], [1], [0, 0, 1, 1], [], []>} : vector<128x128xbf16>, vector<128x128xbf16>, vector<128x128xf32> -> vector<128x128xf32>
    %13 = arith.addf %9, %12 : vector<128x128xf32>
    %c0_13 = arith.constant 0 : index
    %c0_14 = arith.constant 0 : index
    %14 = vector.load %arg5[%c0_13, %c0_14] : memref<1x128xf32, #tpu.memory_space<vmem>>, vector<1x128xf32>
    %15 = vector.broadcast %14 : vector<1x128xf32> to vector<128x128xf32>
    %16 = arith.addf %13, %15 : vector<128x128xf32>
    %cst_15 = arith.constant 0.000000e+00 : f32
    %17 = vector.broadcast %cst_15 : f32 to vector<128x128xf32>
    %18 = arith.maximumf %16, %17 : vector<128x128xf32>
    %19 = arith.truncf %18 : vector<128x128xf32> to vector<128x128xbf16>
    %c0_16 = arith.constant 0 : index
    %c0_17 = arith.constant 0 : index
    %20 = vector.load %arg6[%c0_16, %c0_17] : memref<128x128xbf16, #tpu.memory_space<vmem>>, vector<128x128xbf16>
    %cst_18 = arith.constant dense<0.000000e+00> : vector<128x128xf32>
    %21 = tpu.matmul %19, %20, %cst_18 {dimension_numbers = #tpu.dot_dimension_numbers<[1], [0], [0], [1], [0, 0, 1, 1], [], []>} : vector<128x128xbf16>, vector<128x128xbf16>, vector<128x128xf32> -> vector<128x128xf32>
    %22 = arith.truncf %21 : vector<128x128xf32> to vector<128x128xbf16>
    %cst_19 = arith.constant dense<0.000000e+00> : vector<128x128xf32>
    %23 = tpu.matmul %1, %22, %cst_19 {dimension_numbers = #tpu.dot_dimension_numbers<[1], [0], [0], [1], [0, 0, 1, 1], [], []>} : vector<128x128xbf16>, vector<128x128xbf16>, vector<128x128xf32> -> vector<128x128xf32>
    %c0_20 = arith.constant 0 : index
    %c0_21 = arith.constant 0 : index
    %24 = vector.load %arg2[%c0_20, %c0_21] : memref<128x1xf32, #tpu.memory_space<vmem>>, vector<128x1xf32>
    %25 = vector.broadcast %24 : vector<128x1xf32> to vector<128x128xf32>
    %26 = arith.mulf %23, %25 : vector<128x128xf32>
    %c0_22 = arith.constant 0 : index
    %c0_23 = arith.constant 0 : index
    %27 = vector.load %arg7[%c0_22, %c0_23] : memref<128x128xbf16, #tpu.memory_space<vmem>>, vector<128x128xbf16>
    %cst_24 = arith.constant dense<0.000000e+00> : vector<128x128xf32>
    %28 = tpu.matmul %19, %27, %cst_24 {dimension_numbers = #tpu.dot_dimension_numbers<[1], [0], [0], [1], [0, 0, 1, 1], [], []>} : vector<128x128xbf16>, vector<128x128xbf16>, vector<128x128xf32> -> vector<128x128xf32>
    %29 = arith.addf %26, %28 : vector<128x128xf32>
    %c0_25 = arith.constant 0 : index
    %c0_26 = arith.constant 0 : index
    %30 = vector.load %arg8[%c0_25, %c0_26] : memref<1x128xf32, #tpu.memory_space<vmem>>, vector<1x128xf32>
    %31 = vector.broadcast %30 : vector<1x128xf32> to vector<128x128xf32>
    %32 = arith.addf %29, %31 : vector<128x128xf32>
    %c0_27 = arith.constant 0 : index
    %c0_28 = arith.constant 0 : index
    %33 = vector.load %arg9[%c0_27, %c0_28] : memref<128x128xf32, #tpu.memory_space<vmem>>, vector<128x128xf32>
    tpu.vector_store %arg9[%c0_27, %c0_28], %32 {strides = array<i32>} : memref<128x128xf32, #tpu.memory_space<vmem>>, vector<128x128xf32>,
    return
  }
}

</mosaic_0001>

<llo_original>
// kernel: tpu_custom_call.1
$region0: #{tpu_custom_call.1}
  #allocation0 [shape = 'u32[]', space=smem, size = 0x4, offset = 0x4, fixed_abs, tag = 'smem constant byte address 0x4 - core index']
  #allocation1 [shape = 'u32[144,128]{1,0:T(1,128)}', space=vmem, size = 0x12000, scoped, tag = 'internal scratch']
  %s0 = inlined_call_operand.hbm [shape: s8[128,128], index: 0, kind: input, shape index: {}]
  %s1 = inlined_call_operand.vmem [shape: bf16[128,128], index: 1, kind: input, shape index: {}]
  %s2 = inlined_call_operand.vmem [shape: f32[128,1], index: 2, kind: input, shape index: {}]
  %s3 = inlined_call_operand.vmem [shape: bf16[128,128], index: 3, kind: input, shape index: {}]
  %s4 = inlined_call_operand.hbm [shape: bf16[128,128], index: 4, kind: input, shape index: {}]
  %s5 = inlined_call_operand.vmem [shape: f32[1,128], index: 5, kind: input, shape index: {}]
  %s6 = inlined_call_operand.hbm [shape: bf16[128,128], index: 6, kind: input, shape index: {}]
  %s7 = inlined_call_operand.hbm [shape: bf16[128,128], index: 7, kind: input, shape index: {}]
  %s8 = inlined_call_operand.vmem [shape: f32[1,128], index: 8, kind: input, shape index: {}]
  %s9 = inlined_call_operand.hbm [shape: f32[128,128], index: 9, kind: output, shape index: {}]
  %s10 = sld [smem:[#allocation0]]
  $region62: #{tpu_custom_call.1} parent=0
    _
  %s12 = ssub.s32 1, %s10
  %s13 = scalar_select 0, %s12, %s10
  $region1: #{tpu_custom_call.1} parent=0
    #allocation2 [shape = 'u8[16384]{0}', space=vmem, size = 0x4000, scoped, tag = 'input window, operand 0, single buffered']
    #allocation3 [shape = 's32[1]{0}', space=sflag, size = 0x4, scoped, tag = 'scoped memory for tpu_custom_call.1']
    #allocation4 [shape = 's32[1]{0}', space=sflag, size = 0x4, scoped, tag = 'scoped memory for tpu_custom_call.1']
    #allocation5 [shape = 'u8[32768]{0}', space=vmem, size = 0x8000, scoped, tag = 'input window, operand 4, single buffered']
    #allocation6 [shape = 's32[1]{0}', space=sflag, size = 0x4, scoped, tag = 'scoped memory for tpu_custom_call.1']
    #allocation7 [shape = 'u8[32768]{0}', space=vmem, size = 0x8000, scoped, tag = 'input window, operand 6, single buffered']
    #allocation8 [shape = 'u8[32768]{0}', space=vmem, size = 0x8000, scoped, tag = 'input window, operand 7, single buffered']
    #allocation9 [shape = 's32[1]{0}', space=sflag, size = 0x4, scoped, tag = 'scoped memory for tpu_custom_call.1']
    #allocation10 [shape = 'u8[65536]{0}', space=vmem, size = 0x10000, scoped, tag = 'output window, operand 0, single buffered']
    %14 = vsyncpa [#allocation3], 0
    %15 = vsyncpa [#allocation6], 0
    %16 = vsyncpa [#allocation9], 0
    %17 = vsyncpa [#allocation4], 0
    // Predicated region
    $region2: #{tpu_custom_call.1} parent=1 // pred_check
      _
    $region3: #{tpu_custom_call.1} parent=1 // pred_check_branch
      %19 = sbr.rel (0) target = $region5
    $region4: #{tpu_custom_call.1} parent=1 // pred_region
      %s21 = ssub.s32 512, 512
      %22 = vsyncadd [#allocation3], %s21
      %s23 = sshll.u32 [#allocation2], 4
      %s24 = int_to_ptr.vmem [resolvable:$true] %s23
      %29 = dma.hbm_to_vmem [thread:$0]  %s0, 512, %s24, [#allocation3], 128, 128, 8
    $region5: #{tpu_custom_call.1} parent=1 // pred_fallthru
      _
    // Predicated region
    $region6: #{tpu_custom_call.1} parent=1 // pred_check
      _
    $region7: #{tpu_custom_call.1} parent=1 // pred_check_branch
      %31 = sbr.rel (0) target = $region9
    $region8: #{tpu_custom_call.1} parent=1 // pred_region
      _
    $region9: #{tpu_custom_call.1} parent=1 // pred_fallthru
      _
    // Predicated region
    $region10: #{tpu_custom_call.1} parent=1 // pred_check
      _
    $region11: #{tpu_custom_call.1} parent=1 // pred_check_branch
      %33 = sbr.rel (0) target = $region13
    $region12: #{tpu_custom_call.1} parent=1 // pred_region
      _
    $region13: #{tpu_custom_call.1} parent=1 // pred_fallthru
      _
    // Predicated region
    $region14: #{tpu_custom_call.1} parent=1 // pred_check
      _
    $region15: #{tpu_custom_call.1} parent=1 // pred_check_branch
      %35 = sbr.rel (0) target = $region17
    $region16: #{tpu_custom_call.1} parent=1 // pred_region
      _
    $region17: #{tpu_custom_call.1} parent=1 // pred_fallthru
      _
    // Predicated region
    $region18: #{tpu_custom_call.1} parent=1 // pred_check
      _
    $region19: #{tpu_custom_call.1} parent=1 // pred_check_branch
      %37 = sbr.rel (0) target = $region21
    $region20: #{tpu_custom_call.1} parent=1 // pred_region
      %s39 = ssub.s32 1024, 1024
      %40 = vsyncadd [#allocation6], %s39
      %s41 = sshll.u32 [#allocation5], 4
      %s42 = int_to_ptr.vmem [resolvable:$true] %s41
      %47 = dma.hbm_to_vmem [thread:$0]  %s4, 1024, %s42, [#allocation6], 64, 64, 4
    $region21: #{tpu_custom_call.1} parent=1 // pred_fallthru
      _
    // Predicated region
    $region22: #{tpu_custom_call.1} parent=1 // pred_check
      _
    $region23: #{tpu_custom_call.1} parent=1 // pred_check_branch
      %49 = sbr.rel (0) target = $region25
    $region24: #{tpu_custom_call.1} parent=1 // pred_region
      _
    $region25: #{tpu_custom_call.1} parent=1 // pred_fallthru
      _
    // Predicated region
    $region26: #{tpu_custom_call.1} parent=1 // pred_check
      _
    $region27: #{tpu_custom_call.1} parent=1 // pred_check_branch
      %51 = sbr.rel (0) target = $region29
    $region28: #{tpu_custom_call.1} parent=1 // pred_region
      %s53 = ssub.s32 1024, 1024
      %54 = vsyncadd [#allocation6], %s53
      %s55 = sshll.u32 [#allocation7], 4
      %s56 = int_to_ptr.vmem [resolvable:$true] %s55
      %61 = dma.hbm_to_vmem [thread:$0]  %s6, 1024, %s56, [#allocation6], 64, 64, 4
    $region29: #{tpu_custom_call.1} parent=1 // pred_fallthru
      _
    // Predicated region
    $region30: #{tpu_custom_call.1} parent=1 // pred_check
      _
    $region31: #{tpu_custom_call.1} parent=1 // pred_check_branch
      %63 = sbr.rel (0) target = $region33
    $region32: #{tpu_custom_call.1} parent=1 // pred_region
      %s65 = ssub.s32 1024, 1024
      %66 = vsyncadd [#allocation9], %s65
      %s67 = sshll.u32 [#allocation8], 4
      %s68 = int_to_ptr.vmem [resolvable:$true] %s67
      %73 = dma.hbm_to_vmem [thread:$0]  %s7, 1024, %s68, [#allocation9], 64, 64, 4
    $region33: #{tpu_custom_call.1} parent=1 // pred_fallthru
      _
    // Predicated region
    $region34: #{tpu_custom_call.1} parent=1 // pred_check
      _
    $region35: #{tpu_custom_call.1} parent=1 // pred_check_branch
      %75 = sbr.rel (0) target = $region37
    $region36: #{tpu_custom_call.1} parent=1 // pred_region
      _
    $region37: #{tpu_custom_call.1} parent=1 // pred_fallthru
      _
    // Predicated region
    $region38: #{tpu_custom_call.1} parent=1 // pred_check
      _
    $region39: #{tpu_custom_call.1} parent=1 // pred_check_branch
      %77 = sbr.rel (0) target = $region41
    $region40: #{tpu_custom_call.1} parent=1 // pred_region
      %78 = dma.done [#allocation3], 512
    $region41: #{tpu_custom_call.1} parent=1 // pred_fallthru
      _
    // Predicated region
    $region42: #{tpu_custom_call.1} parent=1 // pred_check
      _
    $region43: #{tpu_custom_call.1} parent=1 // pred_check_branch
      %80 = sbr.rel (0) target = $region45
    $region44: #{tpu_custom_call.1} parent=1 // pred_region
      %81 = dma.done [#allocation6], 1024
    $region45: #{tpu_custom_call.1} parent=1 // pred_fallthru
      _
    // Predicated region
    $region46: #{tpu_custom_call.1} parent=1 // pred_check
      _
    $region47: #{tpu_custom_call.1} parent=1 // pred_check_branch
      %83 = sbr.rel (0) target = $region49
    $region48: #{tpu_custom_call.1} parent=1 // pred_region
      %84 = dma.done [#allocation6], 1024
    $region49: #{tpu_custom_call.1} parent=1 // pred_fallthru
      _
    // Predicated region
    $region50: #{tpu_custom_call.1} parent=1 // pred_check
      _
    $region51: #{tpu_custom_call.1} parent=1 // pred_check_branch
      %86 = sbr.rel (0) target = $region53
    $region52: #{tpu_custom_call.1} parent=1 // pred_region
      %87 = dma.done [#allocation9], 1024
    $region53: #{tpu_custom_call.1} parent=1 // pred_fallthru
      _
    %v89 = vld [vmem:[#allocation2] sm:$0xff]
    %v90 = vld [vmem:[#allocation2 + $0x8] sm:$0xff]
    %v91 = vld [vmem:[#allocation2 + $0x10] sm:$0xff]
    %v92 = vld [vmem:[#allocation2 + $0x18] sm:$0xff]
    %v93 = vunpack.c.l.s8.bf16 %v89
    %v94 = vunpack.c.h.s8.bf16 %v89
    %v95 = vunpack.c.l.s8.bf16 %v90
    %v96 = vunpack.c.h.s8.bf16 %v90
    %v97 = vunpack.c.l.s8.bf16 %v91
    %v98 = vunpack.c.h.s8.bf16 %v91
    %v99 = vunpack.c.l.s8.bf16 %v92
    %v100 = vunpack.c.h.s8.bf16 %v92
    %v101 = vld [vmem:[%s1] sm:$0xf]
    %v102 = vld [vmem:[%s1 + $0x4] sm:$0xf]
    %v103 = vld [vmem:[%s1 + $0x8] sm:$0xf]
    %v104 = vld [vmem:[%s1 + $0xc] sm:$0xf]
    %v105 = vld [vmem:[%s1 + $0x10] sm:$0xf]
    %v106 = vld [vmem:[%s1 + $0x14] sm:$0xf]
    %v107 = vld [vmem:[%s1 + $0x18] sm:$0xf]
    %v108 = vld [vmem:[%s1 + $0x1c] sm:$0xf]
    %v109 = vld [vmem:[%s1 + $0x20] sm:$0xf]
    %v110 = vld [vmem:[%s1 + $0x24] sm:$0xf]
    %v111 = vld [vmem:[%s1 + $0x28] sm:$0xf]
    %v112 = vld [vmem:[%s1 + $0x2c] sm:$0xf]
    %v113 = vld [vmem:[%s1 + $0x30] sm:$0xf]
    %v114 = vld [vmem:[%s1 + $0x34] sm:$0xf]
    %v115 = vld [vmem:[%s1 + $0x38] sm:$0xf]
    %v116 = vld [vmem:[%s1 + $0x3c] sm:$0xf]
    %v133 = vunpack.c.l.b16 %v101
    %v134 = vunpack.c.l.b16 %v102
    %v135 = vunpack.c.l.b16 %v103
    %v136 = vunpack.c.l.b16 %v104
    %v137 = vunpack.c.l.b16 %v105
    %v138 = vunpack.c.l.b16 %v106
    %v139 = vunpack.c.l.b16 %v107
    %v140 = vunpack.c.l.b16 %v108
    %v141 = vunpack.c.l.b16 %v109
    %v142 = vunpack.c.l.b16 %v110
    %v143 = vunpack.c.l.b16 %v111
    %v144 = vunpack.c.l.b16 %v112
    %v145 = vunpack.c.l.b16 %v113
    %v146 = vunpack.c.l.b16 %v114
    %v147 = vunpack.c.l.b16 %v115
    %v148 = vunpack.c.l.b16 %v116
    %v149 = vpack.c.b16 %v134, %v133
    %v150 = vpack.c.b16 %v136, %v135
    %v151 = vpack.c.b16 %v138, %v137
    %v152 = vpack.c.b16 %v140, %v139
    %v153 = vpack.c.b16 %v142, %v141
    %v154 = vpack.c.b16 %v144, %v143
    %v155 = vpack.c.b16 %v146, %v145
    %v156 = vpack.c.b16 %v148, %v147
    %165 = vmatprep.subr.bf16.mxu0 0
    %166 = vmatpush1.bf16.msra.mxu0 %v156
    %167 = vmatprep.subr.bf16.mxu0 0
    %168 = vmatpush1.bf16.msra.mxu0 %v155
    %169 = vmatprep.subr.bf16.mxu0 0
    %170 = vmatpush1.bf16.msra.mxu0 %v154
    %171 = vmatprep.subr.bf16.mxu0 0
    %172 = vmatpush1.bf16.msra.mxu0 %v153
    %173 = vmatprep.subr.bf16.mxu0 0
    %174 = vmatpush1.bf16.msra.mxu0 %v152
    %175 = vmatprep.subr.bf16.mxu0 0
    %176 = vmatpush1.bf16.msra.mxu0 %v151
    %177 = vmatprep.subr.bf16.mxu0 0
    %178 = vmatpush1.bf16.msra.mxu0 %v150
    %179 = vmatprep.subr.bf16.mxu0 0
    %180 = vmatpush1.bf16.msra.mxu0 %v149
    %181 = vmatprep.subr.bf16.mxu0 0
    %182 = vmatpush2.bf16.msra.mxu0 0
    %183 = vmatprep.subr.bf16.mxu0 0
    %184 = vmatpush2.bf16.msra.mxu0 0
    %185 = vmatprep.subr.bf16.mxu0 0
    %186 = vmatpush2.bf16.msra.mxu0 0
    %187 = vmatprep.subr.bf16.mxu0 0
    %188 = vmatpush2.bf16.msra.mxu0 0
    %189 = vmatprep.subr.bf16.mxu0 0
    %190 = vmatpush2.bf16.msra.mxu0 0
    %191 = vmatprep.subr.bf16.mxu0 0
    %192 = vmatpush2.bf16.msra.mxu0 0
    %193 = vmatprep.subr.bf16.mxu0 0
    %194 = vmatpush2.bf16.msra.mxu0 0
    %195 = vmatprep.subr.bf16.mxu0 0
    %196 = vmatpush2.bf16.msra.mxu0 0
    %197 = vmatprep.mubr.bf16.mxu0 0
    %198 = vmatmul.mubr.bf16.gmra.mxu0 %v93
    %v199 = vpop.f32.mrf.mxu0
    %v200 = vadd.f32 0.0, %v199
    %v201 = vpop.f32.mrf.mxu0
    %v202 = vpop.f32.mrf.mxu0
    %v203 = vadd.f32 0.0, %v202
    %v204 = vpop.f32.mrf.mxu0
    %205 = vmatprep.mubr.bf16.mxu0 0
    %206 = vmatmul.mubr.bf16.gmra.mxu0 %v94
    %v207 = vpop.f32.mrf.mxu0
    %v208 = vadd.f32 0.0, %v207
    %v209 = vpop.f32.mrf.mxu0
    %v210 = vpop.f32.mrf.mxu0
    %v211 = vadd.f32 0.0, %v210
    %v212 = vpop.f32.mrf.mxu0
    %213 = vmatprep.mubr.bf16.mxu0 0
    %214 = vmatmul.mubr.bf16.gmra.mxu0 %v95
    %v215 = vpop.f32.mrf.mxu0
    %v216 = vadd.f32 0.0, %v215
    %v217 = vpop.f32.mrf.mxu0
    %v218 = vpop.f32.mrf.mxu0
    %v219 = vadd.f32 0.0, %v218
    %v220 = vpop.f32.mrf.mxu0
    %221 = vmatprep.mubr.bf16.mxu0 0
    %222 = vmatmul.mubr.bf16.gmra.mxu0 %v96
    %v223 = vpop.f32.mrf.mxu0
    %v224 = vadd.f32 0.0, %v223
    %v225 = vpop.f32.mrf.mxu0
    %v226 = vpop.f32.mrf.mxu0
    %v227 = vadd.f32 0.0, %v226
    %v228 = vpop.f32.mrf.mxu0
    %229 = vmatprep.mubr.bf16.mxu0 0
    %230 = vmatmul.mubr.bf16.gmra.mxu0 %v97
    %v231 = vpop.f32.mrf.mxu0
    %v232 = vadd.f32 0.0, %v231
    %v233 = vpop.f32.mrf.mxu0
    %v234 = vpop.f32.mrf.mxu0
    %v235 = vadd.f32 0.0, %v234
    %v236 = vpop.f32.mrf.mxu0
    %237 = vmatprep.mubr.bf16.mxu0 0
    %238 = vmatmul.mubr.bf16.gmra.mxu0 %v98
    %v239 = vpop.f32.mrf.mxu0
    %v240 = vadd.f32 0.0, %v239
    %v241 = vpop.f32.mrf.mxu0
    %v242 = vpop.f32.mrf.mxu0
    %v243 = vadd.f32 0.0, %v242
    %v244 = vpop.f32.mrf.mxu0
    %245 = vmatprep.mubr.bf16.mxu0 0
    %246 = vmatmul.mubr.bf16.gmra.mxu0 %v99
    %v247 = vpop.f32.mrf.mxu0
    %v248 = vadd.f32 0.0, %v247
    %v249 = vpop.f32.mrf.mxu0
    %v250 = vpop.f32.mrf.mxu0
    %v251 = vadd.f32 0.0, %v250
    %v252 = vpop.f32.mrf.mxu0
    %253 = vmatprep.mubr.bf16.mxu0 0
    %254 = vmatmul.mubr.bf16.gmra.mxu0 %v100
    %v255 = vpop.f32.mrf.mxu0
    %v256 = vadd.f32 0.0, %v255
    %v257 = vpop.f32.mrf.mxu0
    %v258 = vpop.f32.mrf.mxu0
    %v259 = vadd.f32 0.0, %v258
    %v260 = vpop.f32.mrf.mxu0
    %261 = vdwg.mxu0
    %v262 = vld [vmem:[%s2] sm:$0xff]
    %v263 = vld [vmem:[%s2 + $0x8] sm:$0xff]
    %v264 = vld [vmem:[%s2 + $0x10] sm:$0xff]
    %v265 = vld [vmem:[%s2 + $0x18] sm:$0xff]
    %v266 = vld [vmem:[%s2 + $0x20] sm:$0xff]
    %v267 = vld [vmem:[%s2 + $0x28] sm:$0xff]
    %v268 = vld [vmem:[%s2 + $0x30] sm:$0xff]
    %v269 = vld [vmem:[%s2 + $0x38] sm:$0xff]
    %v270 = vld [vmem:[%s2 + $0x40] sm:$0xff]
    %v271 = vld [vmem:[%s2 + $0x48] sm:$0xff]
    %v272 = vld [vmem:[%s2 + $0x50] sm:$0xff]
    %v273 = vld [vmem:[%s2 + $0x58] sm:$0xff]
    %v274 = vld [vmem:[%s2 + $0x60] sm:$0xff]
    %v275 = vld [vmem:[%s2 + $0x68] sm:$0xff]
    %v276 = vld [vmem:[%s2 + $0x70] sm:$0xff]
    %v277 = vld [vmem:[%s2 + $0x78] sm:$0xff]
    %279 = vset.pattern.permute.xlu0 0
    %280 = vperm.xlu0 %279, %v262
    %v281 = vpop.permute.xlu0 %280
    %284 = vset.pattern.permute.xlu0 0
    %285 = vperm.xlu0 %284, %v263
    %v286 = vpop.permute.xlu0 %285
    %289 = vset.pattern.permute.xlu0 0
    %290 = vperm.xlu0 %289, %v264
    %v291 = vpop.permute.xlu0 %290
    %294 = vset.pattern.permute.xlu0 0
    %295 = vperm.xlu0 %294, %v265
    %v296 = vpop.permute.xlu0 %295
    %299 = vset.pattern.permute.xlu0 0
    %300 = vperm.xlu0 %299, %v266
    %v301 = vpop.permute.xlu0 %300
    %304 = vset.pattern.permute.xlu0 0
    %305 = vperm.xlu0 %304, %v267
    %v306 = vpop.permute.xlu0 %305
    %309 = vset.pattern.permute.xlu0 0
    %310 = vperm.xlu0 %309, %v268
    %v311 = vpop.permute.xlu0 %310
    %314 = vset.pattern.permute.xlu0 0
    %315 = vperm.xlu0 %314, %v269
    %v316 = vpop.permute.xlu0 %315
    %319 = vset.pattern.permute.xlu0 0
    %320 = vperm.xlu0 %319, %v270
    %v321 = vpop.permute.xlu0 %320
    %324 = vset.pattern.permute.xlu0 0
    %325 = vperm.xlu0 %324, %v271
    %v326 = vpop.permute.xlu0 %325
    %329 = vset.pattern.permute.xlu0 0
    %330 = vperm.xlu0 %329, %v272
    %v331 = vpop.permute.xlu0 %330
    %334 = vset.pattern.permute.xlu0 0
    %335 = vperm.xlu0 %334, %v273
    %v336 = vpop.permute.xlu0 %335
    %339 = vset.pattern.permute.xlu0 0
    %340 = vperm.xlu0 %339, %v274
    %v341 = vpop.permute.xlu0 %340
    %344 = vset.pattern.permute.xlu0 0
    %345 = vperm.xlu0 %344, %v275
    %v346 = vpop.permute.xlu0 %345
    %349 = vset.pattern.permute.xlu0 0
    %350 = vperm.xlu0 %349, %v276
    %v351 = vpop.permute.xlu0 %350
    %354 = vset.pattern.permute.xlu0 0
    %355 = vperm.xlu0 %354, %v277
    %v356 = vpop.permute.xlu0 %355
    %v358 = vmul.f32 %v200, %v281
    %v359 = vmul.f32 %v203, %v286
    %v360 = vmul.f32 %v208, %v291
    %v361 = vmul.f32 %v211, %v296
    %v362 = vmul.f32 %v216, %v301
    %v363 = vmul.f32 %v219, %v306
    %v364 = vmul.f32 %v224, %v311
    %v365 = vmul.f32 %v227, %v316
    %v366 = vmul.f32 %v232, %v321
    %v367 = vmul.f32 %v235, %v326
    %v368 = vmul.f32 %v240, %v331
    %v369 = vmul.f32 %v243, %v336
    %v370 = vmul.f32 %v248, %v341
    %v371 = vmul.f32 %v251, %v346
    %v372 = vmul.f32 %v256, %v351
    %v373 = vmul.f32 %v259, %v356
    %v374 = vpack.c.bf16 %v359, %v358
    %v375 = vpack.c.bf16 %v361, %v360
    %v376 = vpack.c.bf16 %v363, %v362
    %v377 = vpack.c.bf16 %v365, %v364
    %v378 = vpack.c.bf16 %v367, %v366
    %v379 = vpack.c.bf16 %v369, %v368
    %v380 = vpack.c.bf16 %v371, %v370
    %v381 = vpack.c.bf16 %v373, %v372
    %v382 = vld [vmem:[%s3] sm:$0xf]
    %v383 = vld [vmem:[%s3 + $0x4] sm:$0xf]
    %v384 = vld [vmem:[%s3 + $0x8] sm:$0xf]
    %v385 = vld [vmem:[%s3 + $0xc] sm:$0xf]
    %v386 = vld [vmem:[%s3 + $0x10] sm:$0xf]
    %v387 = vld [vmem:[%s3 + $0x14] sm:$0xf]
    %v388 = vld [vmem:[%s3 + $0x18] sm:$0xf]
    %v389 = vld [vmem:[%s3 + $0x1c] sm:$0xf]
    %v390 = vld [vmem:[%s3 + $0x20] sm:$0xf]
    %v391 = vld [vmem:[%s3 + $0x24] sm:$0xf]
    %v392 = vld [vmem:[%s3 + $0x28] sm:$0xf]
    %v393 = vld [vmem:[%s3 + $0x2c] sm:$0xf]
    %v394 = vld [vmem:[%s3 + $0x30] sm:$0xf]
    %v395 = vld [vmem:[%s3 + $0x34] sm:$0xf]
    %v396 = vld [vmem:[%s3 + $0x38] sm:$0xf]
    %v397 = vld [vmem:[%s3 + $0x3c] sm:$0xf]
    %v398 = vld [vmem:[#allocation5] sm:$0xf]
    %v399 = vld [vmem:[#allocation5 + $0x4] sm:$0xf]
    %v400 = vld [vmem:[#allocation5 + $0x8] sm:$0xf]
    %v401 = vld [vmem:[#allocation5 + $0xc] sm:$0xf]
    %v402 = vld [vmem:[#allocation5 + $0x10] sm:$0xf]
    %v403 = vld [vmem:[#allocation5 + $0x14] sm:$0xf]
    %v404 = vld [vmem:[#allocation5 + $0x18] sm:$0xf]
    %v405 = vld [vmem:[#allocation5 + $0x1c] sm:$0xf]
    %v406 = vld [vmem:[#allocation5 + $0x20] sm:$0xf]
    %v407 = vld [vmem:[#allocation5 + $0x24] sm:$0xf]
    %v408 = vld [vmem:[#allocation5 + $0x28] sm:$0xf]
    %v409 = vld [vmem:[#allocation5 + $0x2c] sm:$0xf]
    %v410 = vld [vmem:[#allocation5 + $0x30] sm:$0xf]
    %v411 = vld [vmem:[#allocation5 + $0x34] sm:$0xf]
    %v412 = vld [vmem:[#allocation5 + $0x38] sm:$0xf]
    %v413 = vld [vmem:[#allocation5 + $0x3c] sm:$0xf]
    %v430 = vunpack.c.l.b16 %v398
    %v431 = vunpack.c.l.b16 %v399
    %v432 = vunpack.c.l.b16 %v400
    %v433 = vunpack.c.l.b16 %v401
    %v434 = vunpack.c.l.b16 %v402
    %v435 = vunpack.c.l.b16 %v403
    %v436 = vunpack.c.l.b16 %v404
    %v437 = vunpack.c.l.b16 %v405
    %v438 = vunpack.c.l.b16 %v406
    %v439 = vunpack.c.l.b16 %v407
    %v440 = vunpack.c.l.b16 %v408
    %v441 = vunpack.c.l.b16 %v409
    %v442 = vunpack.c.l.b16 %v410
    %v443 = vunpack.c.l.b16 %v411
    %v444 = vunpack.c.l.b16 %v412
    %v445 = vunpack.c.l.b16 %v413
    %v446 = vpack.c.b16 %v431, %v430
    %v447 = vpack.c.b16 %v433, %v432
    %v448 = vpack.c.b16 %v435, %v434
    %v449 = vpack.c.b16 %v437, %v436
    %v450 = vpack.c.b16 %v439, %v438
    %v451 = vpack.c.b16 %v441, %v440
    %v452 = vpack.c.b16 %v443, %v442
    %v453 = vpack.c.b16 %v445, %v444
    %462 = vmatprep.subr.bf16.mxu0 0
    %463 = vmatpush1.bf16.msra.mxu0 %v453
    %464 = vmatprep.subr.bf16.mxu0 0
    %465 = vmatpush1.bf16.msra.mxu0 %v452
    %466 = vmatprep.subr.bf16.mxu0 0
    %467 = vmatpush1.bf16.msra.mxu0 %v451
    %468 = vmatprep.subr.bf16.mxu0 0
    %469 = vmatpush1.bf16.msra.mxu0 %v450
    %470 = vmatprep.subr.bf16.mxu0 0
    %471 = vmatpush1.bf16.msra.mxu0 %v449
    %472 = vmatprep.subr.bf16.mxu0 0
    %473 = vmatpush1.bf16.msra.mxu0 %v448
    %474 = vmatprep.subr.bf16.mxu0 0
    %475 = vmatpush1.bf16.msra.mxu0 %v447
    %476 = vmatprep.subr.bf16.mxu0 0
    %477 = vmatpush1.bf16.msra.mxu0 %v446
    %478 = vmatprep.subr.bf16.mxu0 0
    %479 = vmatpush2.bf16.msra.mxu0 0
    %480 = vmatprep.subr.bf16.mxu0 0
    %481 = vmatpush2.bf16.msra.mxu0 0
    %482 = vmatprep.subr.bf16.mxu0 0
    %483 = vmatpush2.bf16.msra.mxu0 0
    %484 = vmatprep.subr.bf16.mxu0 0
    %485 = vmatpush2.bf16.msra.mxu0 0
    %486 = vmatprep.subr.bf16.mxu0 0
    %487 = vmatpush2.bf16.msra.mxu0 0
    %488 = vmatprep.subr.bf16.mxu0 0
    %489 = vmatpush2.bf16.msra.mxu0 0
    %490 = vmatprep.subr.bf16.mxu0 0
    %491 = vmatpush2.bf16.msra.mxu0 0
    %492 = vmatprep.subr.bf16.mxu0 0
    %493 = vmatpush2.bf16.msra.mxu0 0
    %494 = vmatprep.mubr.bf16.mxu0 0
    %495 = vmatmul.mubr.bf16.gmra.mxu0 %v149
    %v496 = vpop.f32.mrf.mxu0
    %v497 = vadd.f32 0.0, %v496
    %v498 = vpop.f32.mrf.mxu0
    %v499 = vpop.f32.mrf.mxu0
    %v500 = vadd.f32 0.0, %v499
    %v501 = vpop.f32.mrf.mxu0
    %502 = vmatprep.mubr.bf16.mxu0 0
    %503 = vmatmul.mubr.bf16.gmra.mxu0 %v150
    %v504 = vpop.f32.mrf.mxu0
    %v505 = vadd.f32 0.0, %v504
    %v506 = vpop.f32.mrf.mxu0
    %v507 = vpop.f32.mrf.mxu0
    %v508 = vadd.f32 0.0, %v507
    %v509 = vpop.f32.mrf.mxu0
    %510 = vmatprep.mubr.bf16.mxu0 0
    %511 = vmatmul.mubr.bf16.gmra.mxu0 %v151
    %v512 = vpop.f32.mrf.mxu0
    %v513 = vadd.f32 0.0, %v512
    %v514 = vpop.f32.mrf.mxu0
    %v515 = vpop.f32.mrf.mxu0
    %v516 = vadd.f32 0.0, %v515
    %v517 = vpop.f32.mrf.mxu0
    %518 = vmatprep.mubr.bf16.mxu0 0
    %519 = vmatmul.mubr.bf16.gmra.mxu0 %v152
    %v520 = vpop.f32.mrf.mxu0
    %v521 = vadd.f32 0.0, %v520
    %v522 = vpop.f32.mrf.mxu0
    %v523 = vpop.f32.mrf.mxu0
    %v524 = vadd.f32 0.0, %v523
    %v525 = vpop.f32.mrf.mxu0
    %526 = vmatprep.mubr.bf16.mxu0 0
    %527 = vmatmul.mubr.bf16.gmra.mxu0 %v153
    %v528 = vpop.f32.mrf.mxu0
    %v529 = vadd.f32 0.0, %v528
    %v530 = vpop.f32.mrf.mxu0
    %v531 = vpop.f32.mrf.mxu0
    %v532 = vadd.f32 0.0, %v531
    %v533 = vpop.f32.mrf.mxu0
    %534 = vmatprep.mubr.bf16.mxu0 0
    %535 = vmatmul.mubr.bf16.gmra.mxu0 %v154
    %v536 = vpop.f32.mrf.mxu0
    %v537 = vadd.f32 0.0, %v536
    %v538 = vpop.f32.mrf.mxu0
    %v539 = vpop.f32.mrf.mxu0
    %v540 = vadd.f32 0.0, %v539
    %v541 = vpop.f32.mrf.mxu0
    %542 = vmatprep.mubr.bf16.mxu0 0
    %543 = vmatmul.mubr.bf16.gmra.mxu0 %v155
    %v544 = vpop.f32.mrf.mxu0
    %v545 = vadd.f32 0.0, %v544
    %v546 = vpop.f32.mrf.mxu0
    %v547 = vpop.f32.mrf.mxu0
    %v548 = vadd.f32 0.0, %v547
    %v549 = vpop.f32.mrf.mxu0
    %550 = vmatprep.mubr.bf16.mxu0 0
    %551 = vmatmul.mubr.bf16.gmra.mxu0 %v156
    %v552 = vpop.f32.mrf.mxu0
    %v553 = vadd.f32 0.0, %v552
    %v554 = vpop.f32.mrf.mxu0
    %v555 = vpop.f32.mrf.mxu0
    %v556 = vadd.f32 0.0, %v555
    %v557 = vpop.f32.mrf.mxu0
    %558 = vdwg.mxu0
    %v575 = vunpack.c.l.b16 %v382
    %v576 = vunpack.c.l.b16 %v383
    %v577 = vunpack.c.l.b16 %v384
    %v578 = vunpack.c.l.b16 %v385
    %v579 = vunpack.c.l.b16 %v386
    %v580 = vunpack.c.l.b16 %v387
    %v581 = vunpack.c.l.b16 %v388
    %v582 = vunpack.c.l.b16 %v389
    %v583 = vunpack.c.l.b16 %v390
    %v584 = vunpack.c.l.b16 %v391
    %v585 = vunpack.c.l.b16 %v392
    %v586 = vunpack.c.l.b16 %v393
    %v587 = vunpack.c.l.b16 %v394
    %v588 = vunpack.c.l.b16 %v395
    %v589 = vunpack.c.l.b16 %v396
    %v590 = vunpack.c.l.b16 %v397
    %v591 = vpack.c.b16 %v576, %v575
    %v592 = vpack.c.b16 %v578, %v577
    %v593 = vpack.c.b16 %v580, %v579
    %v594 = vpack.c.b16 %v582, %v581
    %v595 = vpack.c.b16 %v584, %v583
    %v596 = vpack.c.b16 %v586, %v585
    %v597 = vpack.c.b16 %v588, %v587
    %v598 = vpack.c.b16 %v590, %v589
    %607 = vmatprep.subr.bf16.mxu0 0
    %608 = vmatpush1.bf16.msra.mxu0 %v598
    %609 = vmatprep.subr.bf16.mxu0 0
    %610 = vmatpush1.bf16.msra.mxu0 %v597
    %611 = vmatprep.subr.bf16.mxu0 0
    %612 = vmatpush1.bf16.msra.mxu0 %v596
    %613 = vmatprep.subr.bf16.mxu0 0
    %614 = vmatpush1.bf16.msra.mxu0 %v595
    %615 = vmatprep.subr.bf16.mxu0 0
    %616 = vmatpush1.bf16.msra.mxu0 %v594
    %617 = vmatprep.subr.bf16.mxu0 0
    %618 = vmatpush1.bf16.msra.mxu0 %v593
    %619 = vmatprep.subr.bf16.mxu0 0
    %620 = vmatpush1.bf16.msra.mxu0 %v592
    %621 = vmatprep.subr.bf16.mxu0 0
    %622 = vmatpush1.bf16.msra.mxu0 %v591
    %623 = vmatprep.subr.bf16.mxu0 0
    %624 = vmatpush2.bf16.msra.mxu0 0
    %625 = vmatprep.subr.bf16.mxu0 0
    %626 = vmatpush2.bf16.msra.mxu0 0
    %627 = vmatprep.subr.bf16.mxu0 0
    %628 = vmatpush2.bf16.msra.mxu0 0
    %629 = vmatprep.subr.bf16.mxu0 0
    %630 = vmatpush2.bf16.msra.mxu0 0
    %631 = vmatprep.subr.bf16.mxu0 0
    %632 = vmatpush2.bf16.msra.mxu0 0
    %633 = vmatprep.subr.bf16.mxu0 0
    %634 = vmatpush2.bf16.msra.mxu0 0
    %635 = vmatprep.subr.bf16.mxu0 0
    %636 = vmatpush2.bf16.msra.mxu0 0
    %637 = vmatprep.subr.bf16.mxu0 0
    %638 = vmatpush2.bf16.msra.mxu0 0
    %639 = vmatprep.mubr.bf16.mxu0 0
    %640 = vmatmul.mubr.bf16.gmra.mxu0 %v374
    %v641 = vpop.f32.mrf.mxu0
    %v642 = vadd.f32 %v497, %v641
    %v643 = vpop.f32.mrf.mxu0
    %v644 = vpop.f32.mrf.mxu0
    %v645 = vadd.f32 %v500, %v644
    %v646 = vpop.f32.mrf.mxu0
    %647 = vmatprep.mubr.bf16.mxu0 0
    %648 = vmatmul.mubr.bf16.gmra.mxu0 %v375
    %v649 = vpop.f32.mrf.mxu0
    %v650 = vadd.f32 %v505, %v649
    %v651 = vpop.f32.mrf.mxu0
    %v652 = vpop.f32.mrf.mxu0
    %v653 = vadd.f32 %v508, %v652
    %v654 = vpop.f32.mrf.mxu0
    %655 = vmatprep.mubr.bf16.mxu0 0
    %656 = vmatmul.mubr.bf16.gmra.mxu0 %v376
    %v657 = vpop.f32.mrf.mxu0
    %v658 = vadd.f32 %v513, %v657
    %v659 = vpop.f32.mrf.mxu0
    %v660 = vpop.f32.mrf.mxu0
    %v661 = vadd.f32 %v516, %v660
    %v662 = vpop.f32.mrf.mxu0
    %663 = vmatprep.mubr.bf16.mxu0 0
    %664 = vmatmul.mubr.bf16.gmra.mxu0 %v377
    %v665 = vpop.f32.mrf.mxu0
    %v666 = vadd.f32 %v521, %v665
    %v667 = vpop.f32.mrf.mxu0
    %v668 = vpop.f32.mrf.mxu0
    %v669 = vadd.f32 %v524, %v668
    %v670 = vpop.f32.mrf.mxu0
    %671 = vmatprep.mubr.bf16.mxu0 0
    %672 = vmatmul.mubr.bf16.gmra.mxu0 %v378
    %v673 = vpop.f32.mrf.mxu0
    %v674 = vadd.f32 %v529, %v673
    %v675 = vpop.f32.mrf.mxu0
    %v676 = vpop.f32.mrf.mxu0
    %v677 = vadd.f32 %v532, %v676
    %v678 = vpop.f32.mrf.mxu0
    %679 = vmatprep.mubr.bf16.mxu0 0
    %680 = vmatmul.mubr.bf16.gmra.mxu0 %v379
    %v681 = vpop.f32.mrf.mxu0
    %v682 = vadd.f32 %v537, %v681
    %v683 = vpop.f32.mrf.mxu0
    %v684 = vpop.f32.mrf.mxu0
    %v685 = vadd.f32 %v540, %v684
    %v686 = vpop.f32.mrf.mxu0
    %687 = vmatprep.mubr.bf16.mxu0 0
    %688 = vmatmul.mubr.bf16.gmra.mxu0 %v380
    %v689 = vpop.f32.mrf.mxu0
    %v690 = vadd.f32 %v545, %v689
    %v691 = vpop.f32.mrf.mxu0
    %v692 = vpop.f32.mrf.mxu0
    %v693 = vadd.f32 %v548, %v692
    %v694 = vpop.f32.mrf.mxu0
    %695 = vmatprep.mubr.bf16.mxu0 0
    %696 = vmatmul.mubr.bf16.gmra.mxu0 %v381
    %v697 = vpop.f32.mrf.mxu0
    %v698 = vadd.f32 %v553, %v697
    %v699 = vpop.f32.mrf.mxu0
    %v700 = vpop.f32.mrf.mxu0
    %v701 = vadd.f32 %v556, %v700
    %v702 = vpop.f32.mrf.mxu0
    %703 = vdwg.mxu0
    %v704 = vld [vmem:[%s5] sm:$0x1]
    %v706 = vlaneseq
    %v707 = vshrl.u32 %v706, 7
    %v708 = vsub.s32 0, %v707
    %v709 = vrot.slane %v704, %v708
    %v711 = vadd.f32 %v642, %v709
    %v712 = vadd.f32 %v645, %v709
    %v713 = vadd.f32 %v650, %v709
    %v714 = vadd.f32 %v653, %v709
    %v715 = vadd.f32 %v658, %v709
    %v716 = vadd.f32 %v661, %v709
    %v717 = vadd.f32 %v666, %v709
    %v718 = vadd.f32 %v669, %v709
    %v719 = vadd.f32 %v674, %v709
    %v720 = vadd.f32 %v677, %v709
    %v721 = vadd.f32 %v682, %v709
    %v722 = vadd.f32 %v685, %v709
    %v723 = vadd.f32 %v690, %v709
    %v724 = vadd.f32 %v693, %v709
    %v725 = vadd.f32 %v698, %v709
    %v726 = vadd.f32 %v701, %v709
    %v727 = vmax.f32 %v711, 0.0
    %v728 = vmax.f32 %v712, 0.0
    %v729 = vmax.f32 %v713, 0.0
    %v730 = vmax.f32 %v714, 0.0
    %v731 = vmax.f32 %v715, 0.0
    %v732 = vmax.f32 %v716, 0.0
    %v733 = vmax.f32 %v717, 0.0
    %v734 = vmax.f32 %v718, 0.0
    %v735 = vmax.f32 %v719, 0.0
    %v736 = vmax.f32 %v720, 0.0
    %v737 = vmax.f32 %v721, 0.0
    %v738 = vmax.f32 %v722, 0.0
    %v739 = vmax.f32 %v723, 0.0
    %v740 = vmax.f32 %v724, 0.0
    %v741 = vmax.f32 %v725, 0.0
    %v742 = vmax.f32 %v726, 0.0
    %v743 = vpack.c.bf16 %v728, %v727
    %v744 = vpack.c.bf16 %v730, %v729
    %v745 = vpack.c.bf16 %v732, %v731
    %v746 = vpack.c.bf16 %v734, %v733
    %v747 = vpack.c.bf16 %v736, %v735
    %v748 = vpack.c.bf16 %v738, %v737
    %v749 = vpack.c.bf16 %v740, %v739
    %v750 = vpack.c.bf16 %v742, %v741
    %v751 = vld [vmem:[#allocation7] sm:$0xf]
    %v752 = vld [vmem:[#allocation7 + $0x4] sm:$0xf]
    %v753 = vld [vmem:[#allocation7 + $0x8] sm:$0xf]
    %v754 = vld [vmem:[#allocation7 + $0xc] sm:$0xf]
    %v755 = vld [vmem:[#allocation7 + $0x10] sm:$0xf]
    %v756 = vld [vmem:[#allocation7 + $0x14] sm:$0xf]
    %v757 = vld [vmem:[#allocation7 + $0x18] sm:$0xf]
    %v758 = vld [vmem:[#allocation7 + $0x1c] sm:$0xf]
    %v759 = vld [vmem:[#allocation7 + $0x20] sm:$0xf]
    %v760 = vld [vmem:[#allocation7 + $0x24] sm:$0xf]
    %v761 = vld [vmem:[#allocation7 + $0x28] sm:$0xf]
    %v762 = vld [vmem:[#allocation7 + $0x2c] sm:$0xf]
    %v763 = vld [vmem:[#allocation7 + $0x30] sm:$0xf]
    %v764 = vld [vmem:[#allocation7 + $0x34] sm:$0xf]
    %v765 = vld [vmem:[#allocation7 + $0x38] sm:$0xf]
    %v766 = vld [vmem:[#allocation7 + $0x3c] sm:$0xf]
    %v783 = vunpack.c.l.b16 %v751
    %v784 = vunpack.c.l.b16 %v752
    %v785 = vunpack.c.l.b16 %v753
    %v786 = vunpack.c.l.b16 %v754
    %v787 = vunpack.c.l.b16 %v755
    %v788 = vunpack.c.l.b16 %v756
    %v789 = vunpack.c.l.b16 %v757
    %v790 = vunpack.c.l.b16 %v758
    %v791 = vunpack.c.l.b16 %v759
    %v792 = vunpack.c.l.b16 %v760
    %v793 = vunpack.c.l.b16 %v761
    %v794 = vunpack.c.l.b16 %v762
    %v795 = vunpack.c.l.b16 %v763
    %v796 = vunpack.c.l.b16 %v764
    %v797 = vunpack.c.l.b16 %v765
    %v798 = vunpack.c.l.b16 %v766
    %v799 = vpack.c.b16 %v784, %v783
    %v800 = vpack.c.b16 %v786, %v785
    %v801 = vpack.c.b16 %v788, %v787
    %v802 = vpack.c.b16 %v790, %v789
    %v803 = vpack.c.b16 %v792, %v791
    %v804 = vpack.c.b16 %v794, %v793
    %v805 = vpack.c.b16 %v796, %v795
    %v806 = vpack.c.b16 %v798, %v797
    %815 = vmatprep.subr.bf16.mxu0 0
    %816 = vmatpush1.bf16.msra.mxu0 %v806
    %817 = vmatprep.subr.bf16.mxu0 0
    %818 = vmatpush1.bf16.msra.mxu0 %v805
    %819 = vmatprep.subr.bf16.mxu0 0
    %820 = vmatpush1.bf16.msra.mxu0 %v804
    %821 = vmatprep.subr.bf16.mxu0 0
    %822 = vmatpush1.bf16.msra.mxu0 %v803
    %823 = vmatprep.subr.bf16.mxu0 0
    %824 = vmatpush1.bf16.msra.mxu0 %v802
    %825 = vmatprep.subr.bf16.mxu0 0
    %826 = vmatpush1.bf16.msra.mxu0 %v801
    %827 = vmatprep.subr.bf16.mxu0 0
    %828 = vmatpush1.bf16.msra.mxu0 %v800
    %829 = vmatprep.subr.bf16.mxu0 0
    %830 = vmatpush1.bf16.msra.mxu0 %v799
    %831 = vmatprep.subr.bf16.mxu0 0
    %832 = vmatpush2.bf16.msra.mxu0 0
    %833 = vmatprep.subr.bf16.mxu0 0
    %834 = vmatpush2.bf16.msra.mxu0 0
    %835 = vmatprep.subr.bf16.mxu0 0
    %836 = vmatpush2.bf16.msra.mxu0 0
    %837 = vmatprep.subr.bf16.mxu0 0
    %838 = vmatpush2.bf16.msra.mxu0 0
    %839 = vmatprep.subr.bf16.mxu0 0
    %840 = vmatpush2.bf16.msra.mxu0 0
    %841 = vmatprep.subr.bf16.mxu0 0
    %842 = vmatpush2.bf16.msra.mxu0 0
    %843 = vmatprep.subr.bf16.mxu0 0
    %844 = vmatpush2.bf16.msra.mxu0 0
    %845 = vmatprep.subr.bf16.mxu0 0
    %846 = vmatpush2.bf16.msra.mxu0 0
    %847 = vmatprep.mubr.bf16.mxu0 0
    %848 = vmatmul.mubr.bf16.gmra.mxu0 %v743
    %v849 = vpop.f32.mrf.mxu0
    %v850 = vadd.f32 0.0, %v849
    %v851 = vpop.f32.mrf.mxu0
    %v852 = vpop.f32.mrf.mxu0
    %v853 = vadd.f32 0.0, %v852
    %v854 = vpop.f32.mrf.mxu0
    %855 = vmatprep.mubr.bf16.mxu0 0
    %856 = vmatmul.mubr.bf16.gmra.mxu0 %v744
    %v857 = vpop.f32.mrf.mxu0
    %v858 = vadd.f32 0.0, %v857
    %v859 = vpop.f32.mrf.mxu0
    %v860 = vpop.f32.mrf.mxu0
    %v861 = vadd.f32 0.0, %v860
    %v862 = vpop.f32.mrf.mxu0
    %863 = vmatprep.mubr.bf16.mxu0 0
    %864 = vmatmul.mubr.bf16.gmra.mxu0 %v745
    %v865 = vpop.f32.mrf.mxu0
    %v866 = vadd.f32 0.0, %v865
    %v867 = vpop.f32.mrf.mxu0
    %v868 = vpop.f32.mrf.mxu0
    %v869 = vadd.f32 0.0, %v868
    %v870 = vpop.f32.mrf.mxu0
    %871 = vmatprep.mubr.bf16.mxu0 0
    %872 = vmatmul.mubr.bf16.gmra.mxu0 %v746
    %v873 = vpop.f32.mrf.mxu0
    %v874 = vadd.f32 0.0, %v873
    %v875 = vpop.f32.mrf.mxu0
    %v876 = vpop.f32.mrf.mxu0
    %v877 = vadd.f32 0.0, %v876
    %v878 = vpop.f32.mrf.mxu0
    %879 = vmatprep.mubr.bf16.mxu0 0
    %880 = vmatmul.mubr.bf16.gmra.mxu0 %v747
    %v881 = vpop.f32.mrf.mxu0
    %v882 = vadd.f32 0.0, %v881
    %v883 = vpop.f32.mrf.mxu0
    %v884 = vpop.f32.mrf.mxu0
    %v885 = vadd.f32 0.0, %v884
    %v886 = vpop.f32.mrf.mxu0
    %887 = vmatprep.mubr.bf16.mxu0 0
    %888 = vmatmul.mubr.bf16.gmra.mxu0 %v748
    %v889 = vpop.f32.mrf.mxu0
    %v890 = vadd.f32 0.0, %v889
    %v891 = vpop.f32.mrf.mxu0
    %v892 = vpop.f32.mrf.mxu0
    %v893 = vadd.f32 0.0, %v892
    %v894 = vpop.f32.mrf.mxu0
    %895 = vmatprep.mubr.bf16.mxu0 0
    %896 = vmatmul.mubr.bf16.gmra.mxu0 %v749
    %v897 = vpop.f32.mrf.mxu0
    %v898 = vadd.f32 0.0, %v897
    %v899 = vpop.f32.mrf.mxu0
    %v900 = vpop.f32.mrf.mxu0
    %v901 = vadd.f32 0.0, %v900
    %v902 = vpop.f32.mrf.mxu0
    %903 = vmatprep.mubr.bf16.mxu0 0
    %904 = vmatmul.mubr.bf16.gmra.mxu0 %v750
    %v905 = vpop.f32.mrf.mxu0
    %v906 = vadd.f32 0.0, %v905
    %v907 = vpop.f32.mrf.mxu0
    %v908 = vpop.f32.mrf.mxu0
    %v909 = vadd.f32 0.0, %v908
    %v910 = vpop.f32.mrf.mxu0
    %911 = vdwg.mxu0
    %v912 = vpack.c.bf16 %v853, %v850
    %v913 = vpack.c.bf16 %v861, %v858
    %v914 = vpack.c.bf16 %v869, %v866
    %v915 = vpack.c.bf16 %v877, %v874
    %v916 = vpack.c.bf16 %v885, %v882
    %v917 = vpack.c.bf16 %v893, %v890
    %v918 = vpack.c.bf16 %v901, %v898
    %v919 = vpack.c.bf16 %v909, %v906
    %920 = vmatprep.subr.bf16.mxu0 0
    %921 = vmatpush1.bf16.msra.mxu0 %v919
    %922 = vmatprep.subr.bf16.mxu0 0
    %923 = vmatpush1.bf16.msra.mxu0 %v918
    %924 = vmatprep.subr.bf16.mxu0 0
    %925 = vmatpush1.bf16.msra.mxu0 %v917
    %926 = vmatprep.subr.bf16.mxu0 0
    %927 = vmatpush1.bf16.msra.mxu0 %v916
    %928 = vmatprep.subr.bf16.mxu0 0
    %929 = vmatpush1.bf16.msra.mxu0 %v915
    %930 = vmatprep.subr.bf16.mxu0 0
    %931 = vmatpush1.bf16.msra.mxu0 %v914
    %932 = vmatprep.subr.bf16.mxu0 0
    %933 = vmatpush1.bf16.msra.mxu0 %v913
    %934 = vmatprep.subr.bf16.mxu0 0
    %935 = vmatpush1.bf16.msra.mxu0 %v912
    %936 = vmatprep.subr.bf16.mxu0 0
    %937 = vmatpush2.bf16.msra.mxu0 0
    %938 = vmatprep.subr.bf16.mxu0 0
    %939 = vmatpush2.bf16.msra.mxu0 0
    %940 = vmatprep.subr.bf16.mxu0 0
    %941 = vmatpush2.bf16.msra.mxu0 0
    %942 = vmatprep.subr.bf16.mxu0 0
    %943 = vmatpush2.bf16.msra.mxu0 0
    %944 = vmatprep.subr.bf16.mxu0 0
    %945 = vmatpush2.bf16.msra.mxu0 0
    %946 = vmatprep.subr.bf16.mxu0 0
    %947 = vmatpush2.bf16.msra.mxu0 0
    %948 = vmatprep.subr.bf16.mxu0 0
    %949 = vmatpush2.bf16.msra.mxu0 0
    %950 = vmatprep.subr.bf16.mxu0 0
    %951 = vmatpush2.bf16.msra.mxu0 0
    %952 = vmatprep.mubr.bf16.mxu0 0
    %953 = vmatmul.mubr.bf16.gmra.mxu0 %v93
    %v954 = vpop.f32.mrf.mxu0
    %v955 = vadd.f32 0.0, %v954
    %v956 = vpop.f32.mrf.mxu0
    %v957 = vpop.f32.mrf.mxu0
    %v958 = vadd.f32 0.0, %v957
    %v959 = vpop.f32.mrf.mxu0
    %960 = vmatprep.mubr.bf16.mxu0 0
    %961 = vmatmul.mubr.bf16.gmra.mxu0 %v94
    %v962 = vpop.f32.mrf.mxu0
    %v963 = vadd.f32 0.0, %v962
    %v964 = vpop.f32.mrf.mxu0
    %v965 = vpop.f32.mrf.mxu0
    %v966 = vadd.f32 0.0, %v965
    %v967 = vpop.f32.mrf.mxu0
    %968 = vmatprep.mubr.bf16.mxu0 0
    %969 = vmatmul.mubr.bf16.gmra.mxu0 %v95
    %v970 = vpop.f32.mrf.mxu0
    %v971 = vadd.f32 0.0, %v970
    %v972 = vpop.f32.mrf.mxu0
    %v973 = vpop.f32.mrf.mxu0
    %v974 = vadd.f32 0.0, %v973
    %v975 = vpop.f32.mrf.mxu0
    %976 = vmatprep.mubr.bf16.mxu0 0
    %977 = vmatmul.mubr.bf16.gmra.mxu0 %v96
    %v978 = vpop.f32.mrf.mxu0
    %v979 = vadd.f32 0.0, %v978
    %v980 = vpop.f32.mrf.mxu0
    %v981 = vpop.f32.mrf.mxu0
    %v982 = vadd.f32 0.0, %v981
    %v983 = vpop.f32.mrf.mxu0
    %984 = vmatprep.mubr.bf16.mxu0 0
    %985 = vmatmul.mubr.bf16.gmra.mxu0 %v97
    %v986 = vpop.f32.mrf.mxu0
    %v987 = vadd.f32 0.0, %v986
    %v988 = vpop.f32.mrf.mxu0
    %v989 = vpop.f32.mrf.mxu0
    %v990 = vadd.f32 0.0, %v989
    %v991 = vpop.f32.mrf.mxu0
    %992 = vmatprep.mubr.bf16.mxu0 0
    %993 = vmatmul.mubr.bf16.gmra.mxu0 %v98
    %v994 = vpop.f32.mrf.mxu0
    %v995 = vadd.f32 0.0, %v994
    %v996 = vpop.f32.mrf.mxu0
    %v997 = vpop.f32.mrf.mxu0
    %v998 = vadd.f32 0.0, %v997
    %v999 = vpop.f32.mrf.mxu0
    %1000 = vmatprep.mubr.bf16.mxu0 0
    %1001 = vmatmul.mubr.bf16.gmra.mxu0 %v99
    %v1002 = vpop.f32.mrf.mxu0
    %v1003 = vadd.f32 0.0, %v1002
    %v1004 = vpop.f32.mrf.mxu0
    %v1005 = vpop.f32.mrf.mxu0
    %v1006 = vadd.f32 0.0, %v1005
    %v1007 = vpop.f32.mrf.mxu0
    %1008 = vmatprep.mubr.bf16.mxu0 0
    %1009 = vmatmul.mubr.bf16.gmra.mxu0 %v100
    %v1010 = vpop.f32.mrf.mxu0
    %v1011 = vadd.f32 0.0, %v1010
    %v1012 = vpop.f32.mrf.mxu0
    %v1013 = vpop.f32.mrf.mxu0
    %v1014 = vadd.f32 0.0, %v1013
    %v1015 = vpop.f32.mrf.mxu0
    %1016 = vdwg.mxu0
    %v1017 = vmul.f32 %v955, %v281
    %v1018 = vmul.f32 %v958, %v286
    %v1019 = vmul.f32 %v963, %v291
    %v1020 = vmul.f32 %v966, %v296
    %v1021 = vmul.f32 %v971, %v301
    %v1022 = vmul.f32 %v974, %v306
    %v1023 = vmul.f32 %v979, %v311
    %v1024 = vmul.f32 %v982, %v316
    %v1025 = vmul.f32 %v987, %v321
    %v1026 = vmul.f32 %v990, %v326
    %v1027 = vmul.f32 %v995, %v331
    %v1028 = vmul.f32 %v998, %v336
    %v1029 = vmul.f32 %v1003, %v341
    %v1030 = vmul.f32 %v1006, %v346
    %v1031 = vmul.f32 %v1011, %v351
    %v1032 = vmul.f32 %v1014, %v356
    %v1033 = vld [vmem:[#allocation8] sm:$0xf]
    %v1034 = vld [vmem:[#allocation8 + $0x4] sm:$0xf]
    %v1035 = vld [vmem:[#allocation8 + $0x8] sm:$0xf]
    %v1036 = vld [vmem:[#allocation8 + $0xc] sm:$0xf]
    %v1037 = vld [vmem:[#allocation8 + $0x10] sm:$0xf]
    %v1038 = vld [vmem:[#allocation8 + $0x14] sm:$0xf]
    %v1039 = vld [vmem:[#allocation8 + $0x18] sm:$0xf]
    %v1040 = vld [vmem:[#allocation8 + $0x1c] sm:$0xf]
    %v1041 = vld [vmem:[#allocation8 + $0x20] sm:$0xf]
    %v1042 = vld [vmem:[#allocation8 + $0x24] sm:$0xf]
    %v1043 = vld [vmem:[#allocation8 + $0x28] sm:$0xf]
    %v1044 = vld [vmem:[#allocation8 + $0x2c] sm:$0xf]
    %v1045 = vld [vmem:[#allocation8 + $0x30] sm:$0xf]
    %v1046 = vld [vmem:[#allocation8 + $0x34] sm:$0xf]
    %v1047 = vld [vmem:[#allocation8 + $0x38] sm:$0xf]
    %v1048 = vld [vmem:[#allocation8 + $0x3c] sm:$0xf]
    %v1065 = vunpack.c.l.b16 %v1033
    %v1066 = vunpack.c.l.b16 %v1034
    %v1067 = vunpack.c.l.b16 %v1035
    %v1068 = vunpack.c.l.b16 %v1036
    %v1069 = vunpack.c.l.b16 %v1037
    %v1070 = vunpack.c.l.b16 %v1038
    %v1071 = vunpack.c.l.b16 %v1039
    %v1072 = vunpack.c.l.b16 %v1040
    %v1073 = vunpack.c.l.b16 %v1041
    %v1074 = vunpack.c.l.b16 %v1042
    %v1075 = vunpack.c.l.b16 %v1043
    %v1076 = vunpack.c.l.b16 %v1044
    %v1077 = vunpack.c.l.b16 %v1045
    %v1078 = vunpack.c.l.b16 %v1046
    %v1079 = vunpack.c.l.b16 %v1047
    %v1080 = vunpack.c.l.b16 %v1048
    %v1081 = vpack.c.b16 %v1066, %v1065
    %v1082 = vpack.c.b16 %v1068, %v1067
    %v1083 = vpack.c.b16 %v1070, %v1069
    %v1084 = vpack.c.b16 %v1072, %v1071
    %v1085 = vpack.c.b16 %v1074, %v1073
    %v1086 = vpack.c.b16 %v1076, %v1075
    %v1087 = vpack.c.b16 %v1078, %v1077
    %v1088 = vpack.c.b16 %v1080, %v1079
    %1097 = vmatprep.subr.bf16.mxu0 0
    %1098 = vmatpush1.bf16.msra.mxu0 %v1088
    %1099 = vmatprep.subr.bf16.mxu0 0
    %1100 = vmatpush1.bf16.msra.mxu0 %v1087
    %1101 = vmatprep.subr.bf16.mxu0 0
    %1102 = vmatpush1.bf16.msra.mxu0 %v1086
    %1103 = vmatprep.subr.bf16.mxu0 0
    %1104 = vmatpush1.bf16.msra.mxu0 %v1085
    %1105 = vmatprep.subr.bf16.mxu0 0
    %1106 = vmatpush1.bf16.msra.mxu0 %v1084
    %1107 = vmatprep.subr.bf16.mxu0 0
    %1108 = vmatpush1.bf16.msra.mxu0 %v1083
    %1109 = vmatprep.subr.bf16.mxu0 0
    %1110 = vmatpush1.bf16.msra.mxu0 %v1082
    %1111 = vmatprep.subr.bf16.mxu0 0
    %1112 = vmatpush1.bf16.msra.mxu0 %v1081
    %1113 = vmatprep.subr.bf16.mxu0 0
    %1114 = vmatpush2.bf16.msra.mxu0 0
    %1115 = vmatprep.subr.bf16.mxu0 0
    %1116 = vmatpush2.bf16.msra.mxu0 0
    %1117 = vmatprep.subr.bf16.mxu0 0
    %1118 = vmatpush2.bf16.msra.mxu0 0
    %1119 = vmatprep.subr.bf16.mxu0 0
    %1120 = vmatpush2.bf16.msra.mxu0 0
    %1121 = vmatprep.subr.bf16.mxu0 0
    %1122 = vmatpush2.bf16.msra.mxu0 0
    %1123 = vmatprep.subr.bf16.mxu0 0
    %1124 = vmatpush2.bf16.msra.mxu0 0
    %1125 = vmatprep.subr.bf16.mxu0 0
    %1126 = vmatpush2.bf16.msra.mxu0 0
    %1127 = vmatprep.subr.bf16.mxu0 0
    %1128 = vmatpush2.bf16.msra.mxu0 0
    %1129 = vmatprep.mubr.bf16.mxu0 0
    %1130 = vmatmul.mubr.bf16.gmra.mxu0 %v743
    %v1131 = vpop.f32.mrf.mxu0
    %v1132 = vadd.f32 0.0, %v1131
    %v1133 = vpop.f32.mrf.mxu0
    %v1134 = vpop.f32.mrf.mxu0
    %v1135 = vadd.f32 0.0, %v1134
    %v1136 = vpop.f32.mrf.mxu0
    %1137 = vmatprep.mubr.bf16.mxu0 0
    %1138 = vmatmul.mubr.bf16.gmra.mxu0 %v744
    %v1139 = vpop.f32.mrf.mxu0
    %v1140 = vadd.f32 0.0, %v1139
    %v1141 = vpop.f32.mrf.mxu0
    %v1142 = vpop.f32.mrf.mxu0
    %v1143 = vadd.f32 0.0, %v1142
    %v1144 = vpop.f32.mrf.mxu0
    %1145 = vmatprep.mubr.bf16.mxu0 0
    %1146 = vmatmul.mubr.bf16.gmra.mxu0 %v745
    %v1147 = vpop.f32.mrf.mxu0
    %v1148 = vadd.f32 0.0, %v1147
    %v1149 = vpop.f32.mrf.mxu0
    %v1150 = vpop.f32.mrf.mxu0
    %v1151 = vadd.f32 0.0, %v1150
    %v1152 = vpop.f32.mrf.mxu0
    %1153 = vmatprep.mubr.bf16.mxu0 0
    %1154 = vmatmul.mubr.bf16.gmra.mxu0 %v746
    %v1155 = vpop.f32.mrf.mxu0
    %v1156 = vadd.f32 0.0, %v1155
    %v1157 = vpop.f32.mrf.mxu0
    %v1158 = vpop.f32.mrf.mxu0
    %v1159 = vadd.f32 0.0, %v1158
    %v1160 = vpop.f32.mrf.mxu0
    %1161 = vmatprep.mubr.bf16.mxu0 0
    %1162 = vmatmul.mubr.bf16.gmra.mxu0 %v747
    %v1163 = vpop.f32.mrf.mxu0
    %v1164 = vadd.f32 0.0, %v1163
    %v1165 = vpop.f32.mrf.mxu0
    %v1166 = vpop.f32.mrf.mxu0
    %v1167 = vadd.f32 0.0, %v1166
    %v1168 = vpop.f32.mrf.mxu0
    %1169 = vmatprep.mubr.bf16.mxu0 0
    %1170 = vmatmul.mubr.bf16.gmra.mxu0 %v748
    %v1171 = vpop.f32.mrf.mxu0
    %v1172 = vadd.f32 0.0, %v1171
    %v1173 = vpop.f32.mrf.mxu0
    %v1174 = vpop.f32.mrf.mxu0
    %v1175 = vadd.f32 0.0, %v1174
    %v1176 = vpop.f32.mrf.mxu0
    %1177 = vmatprep.mubr.bf16.mxu0 0
    %1178 = vmatmul.mubr.bf16.gmra.mxu0 %v749
    %v1179 = vpop.f32.mrf.mxu0
    %v1180 = vadd.f32 0.0, %v1179
    %v1181 = vpop.f32.mrf.mxu0
    %v1182 = vpop.f32.mrf.mxu0
    %v1183 = vadd.f32 0.0, %v1182
    %v1184 = vpop.f32.mrf.mxu0
    %1185 = vmatprep.mubr.bf16.mxu0 0
    %1186 = vmatmul.mubr.bf16.gmra.mxu0 %v750
    %v1187 = vpop.f32.mrf.mxu0
    %v1188 = vadd.f32 0.0, %v1187
    %v1189 = vpop.f32.mrf.mxu0
    %v1190 = vpop.f32.mrf.mxu0
    %v1191 = vadd.f32 0.0, %v1190
    %v1192 = vpop.f32.mrf.mxu0
    %1193 = vdwg.mxu0
    %v1194 = vadd.f32 %v1017, %v1132
    %v1195 = vadd.f32 %v1018, %v1135
    %v1196 = vadd.f32 %v1019, %v1140
    %v1197 = vadd.f32 %v1020, %v1143
    %v1198 = vadd.f32 %v1021, %v1148
    %v1199 = vadd.f32 %v1022, %v1151
    %v1200 = vadd.f32 %v1023, %v1156
    %v1201 = vadd.f32 %v1024, %v1159
    %v1202 = vadd.f32 %v1025, %v1164
    %v1203 = vadd.f32 %v1026, %v1167
    %v1204 = vadd.f32 %v1027, %v1172
    %v1205 = vadd.f32 %v1028, %v1175
    %v1206 = vadd.f32 %v1029, %v1180
    %v1207 = vadd.f32 %v1030, %v1183
    %v1208 = vadd.f32 %v1031, %v1188
    %v1209 = vadd.f32 %v1032, %v1191
    %v1210 = vld [vmem:[%s8] sm:$0x1]
    %v1212 = vlaneseq
    %v1213 = vshrl.u32 %v1212, 7
    %v1214 = vsub.s32 0, %v1213
    %v1215 = vrot.slane %v1210, %v1214
    %v1217 = vadd.f32 %v1194, %v1215
    %v1218 = vadd.f32 %v1195, %v1215
    %v1219 = vadd.f32 %v1196, %v1215
    %v1220 = vadd.f32 %v1197, %v1215
    %v1221 = vadd.f32 %v1198, %v1215
    %v1222 = vadd.f32 %v1199, %v1215
    %v1223 = vadd.f32 %v1200, %v1215
    %v1224 = vadd.f32 %v1201, %v1215
    %v1225 = vadd.f32 %v1202, %v1215
    %v1226 = vadd.f32 %v1203, %v1215
    %v1227 = vadd.f32 %v1204, %v1215
    %v1228 = vadd.f32 %v1205, %v1215
    %v1229 = vadd.f32 %v1206, %v1215
    %v1230 = vadd.f32 %v1207, %v1215
    %v1231 = vadd.f32 %v1208, %v1215
    %v1232 = vadd.f32 %v1209, %v1215
    %1233 = vst [vmem:[#allocation10] sm:$0xff] %v1217
    %1234 = vst [vmem:[#allocation10 + $0x8] sm:$0xff] %v1218
    %1235 = vst [vmem:[#allocation10 + $0x10] sm:$0xff] %v1219
    %1236 = vst [vmem:[#allocation10 + $0x18] sm:$0xff] %v1220
    %1237 = vst [vmem:[#allocation10 + $0x20] sm:$0xff] %v1221
    %1238 = vst [vmem:[#allocation10 + $0x28] sm:$0xff] %v1222
    %1239 = vst [vmem:[#allocation10 + $0x30] sm:$0xff] %v1223
    %1240 = vst [vmem:[#allocation10 + $0x38] sm:$0xff] %v1224
    %1241 = vst [vmem:[#allocation10 + $0x40] sm:$0xff] %v1225
    %1242 = vst [vmem:[#allocation10 + $0x48] sm:$0xff] %v1226
    %1243 = vst [vmem:[#allocation10 + $0x50] sm:$0xff] %v1227
    %1244 = vst [vmem:[#allocation10 + $0x58] sm:$0xff] %v1228
    %1245 = vst [vmem:[#allocation10 + $0x60] sm:$0xff] %v1229
    %1246 = vst [vmem:[#allocation10 + $0x68] sm:$0xff] %v1230
    %1247 = vst [vmem:[#allocation10 + $0x70] sm:$0xff] %v1231
    %1248 = vst [vmem:[#allocation10 + $0x78] sm:$0xff] %v1232
    // Predicated region
    $region54: #{tpu_custom_call.1} parent=1 // pred_check
      _
    $region55: #{tpu_custom_call.1} parent=1 // pred_check_branch
      %1250 = sbr.rel (0) target = $region57
    $region56: #{tpu_custom_call.1} parent=1 // pred_region
      %s1252 = ssub.s32 2048, 2048
      %1253 = vsyncadd [#allocation4], %s1252
      %s1254 = sshll.u32 [#allocation10], 4
      %s1255 = int_to_ptr.vmem [resolvable:$true] %s1254
      %1260 = dma.vmem_to_hbm [thread:$0]  %s1255, 2048, %s9, [#allocation4], 128, 128, 8
    $region57: #{tpu_custom_call.1} parent=1 // pred_fallthru
      _
    // Predicated region
    $region58: #{tpu_custom_call.1} parent=1 // pred_check
      _
    $region59: #{tpu_custom_call.1} parent=1 // pred_check_branch
      %1262 = sbr.rel (0) target = $region61
    $region60: #{tpu_custom_call.1} parent=1 // pred_region
      %1263 = dma.done [#allocation4], 2048
    $region61: #{tpu_custom_call.1} parent=1 // pred_fallthru
      _
    %1264 = vsyncpa [#allocation3], 1
    %1265 = vsyncpa [#allocation6], 1
    %1266 = vsyncpa [#allocation9], 1
    %1267 = vsyncpa [#allocation4], 1

</llo_original>
